<compile_context>
chip_gen: v5e
topology: v5e:2x2
jax: 0.10.0
libtpu: 0.0.40
codegen_flags: <defaults>
</compile_context>

<pallas_src>
import functools

import jax
import jax.numpy as jnp
from jax import lax
from jax.experimental import pallas as pl
from jax.experimental.pallas import tpu as pltpu


def _round_up(n, m):
    return ((n + m - 1) // m) * m


def _mlp_kernel(x_ref, w1_ref, b1_ref, w2_ref, b2_ref, w3_ref, b3_ref, o_ref,
                *, sub, unroll):
    # Hoist all weight reads and the bias broadcasts out of the sub-chunk loop
    # (read / broadcast once per grid step).
    w1 = w1_ref[...]
    w2 = w2_ref[...]
    w3 = w3_ref[...]
    b1 = jnp.broadcast_to(b1_ref[...], (sub, w1_ref.shape[1]))
    b2 = jnp.broadcast_to(b2_ref[...], (sub, w2_ref.shape[1]))
    b3 = jnp.broadcast_to(b3_ref[...], (sub, w3_ref.shape[1]))

    def layer(h, w, b):
        # MXU matmul with f32 accumulation; bias add + tanh in f32 (VPU/EUP).
        y = jnp.dot(h.astype(w.dtype), w, preferred_element_type=jnp.float32)
        return jnp.tanh(y + b)

    n_sub = x_ref.shape[0] // sub

    def body(s, carry):
        r = pl.multiple_of(s * sub, sub)
        h = x_ref[pl.ds(r, sub), :]
        h = layer(h, w1, b1)
        h = layer(h, w2, b2)
        h = layer(h, w3, b3)
        o_ref[pl.ds(r, sub), :] = h.astype(o_ref.dtype)
        return carry

    # Bounded unroll: keeps h1/h2 live ranges small without exceeding 64 vregs.
    lax.fori_loop(0, n_sub, body, 0, unroll=unroll)


@functools.partial(
    jax.jit, static_argnames=("batch_tile", "sub_chunk", "use_bf16")
)
def feature_extractor_forward(x, params, *, batch_tile=1024, sub_chunk=256,
                              use_bf16=True):
    """x: (B, num_inputs). params: dict of w1,b1,w2,b2,w3,b3. Returns f32 (B, num_outputs)."""
    w1, b1 = params["w1"], params["b1"]
    w2, b2 = params["w2"], params["b2"]
    w3, b3 = params["w3"], params["b3"]

    B, num_inputs = x.shape
    num_outputs = w3.shape[1]

    # Sublane granularity: f32 tiles are (8,128); bf16 operand tiles are (16,128).
    granule = 16 if use_bf16 else 8
    b_r = _round_up(B, granule)

    # Rows presented to the MXU per matmul.
    sub = max(granule, min(_round_up(sub_chunk, granule), b_r))

    # Batch tile: as large as useful, but balanced across grid steps (helps
    # v7x's two TensorCores under "parallel"). No divisibility requirement on B.
    bt_cap = max(sub, min(_round_up(batch_tile, sub), _round_up(b_r, sub)))
    n_steps = pl.cdiv(b_r, bt_cap)
    bt = max(sub, _round_up(pl.cdiv(b_r, n_steps), sub))
    n_sub = bt // sub

    if use_bf16:
        # bf16 MXU operands (all generations); accumulation stays f32 in-kernel.
        # NOTE: casting x here is a separate XLA pass over x; callers that can
        # supply x already in bf16 avoid it and halve the x HBM stream for free.
        if x.dtype != jnp.bfloat16:
            x = x.astype(jnp.bfloat16)
        w1 = w1.astype(jnp.bfloat16)
        w2 = w2.astype(jnp.bfloat16)
        w3 = w3.astype(jnp.bfloat16)

    grid = (pl.cdiv(B, bt),)
    kernel = functools.partial(_mlp_kernel, sub=sub, unroll=min(2, n_sub))

    out = pl.pallas_call(
        kernel,
        out_shape=jax.ShapeDtypeStruct((B, num_outputs), jnp.float32),
        grid_spec=pltpu.PrefetchScalarGridSpec(
            num_scalar_prefetch=0,
            grid=grid,
            in_specs=[
                pl.BlockSpec((bt, num_inputs), lambda i: (i, 0)),  # x tile
                pl.BlockSpec(w1.shape, lambda i: (0, 0)),          # w1 (replicated)
                pl.BlockSpec(b1.shape, lambda i: (0, 0)),          # b1
                pl.BlockSpec(w2.shape, lambda i: (0, 0)),          # w2
                pl.BlockSpec(b2.shape, lambda i: (0, 0)),          # b2
                pl.BlockSpec(w3.shape, lambda i: (0, 0)),          # w3
                pl.BlockSpec(b3.shape, lambda i: (0, 0)),          # b3
            ],
            out_specs=pl.BlockSpec((bt, num_outputs), lambda i: (i, 0)),
        ),
        compiler_params=pltpu.CompilerParams(
            dimension_semantics=("parallel",),  # shard batch across TCs (v7x)
        ),
    )(x, w1, b1, w2, b2, w3, b3)

    return out


def init_params(key, num_inputs, num_outputs):
    """Deterministic init mimicking nn.Linear default (uniform +/- 1/sqrt(fan_in))."""
    dims = [(num_inputs, 64), (64, 48), (48, num_outputs)]
    params = {}
    for idx, (fan_in, fan_out) in enumerate(dims, start=1):
        key, kw, kb = jax.random.split(key, 3)
        bound = 1.0 / jnp.sqrt(float(fan_in))
        params[f"w{idx}"] = jax.random.uniform(
            kw, (fan_in, fan_out), jnp.float32, minval=-bound, maxval=bound
        )
        params[f"b{idx}"] = jax.random.uniform(
            kb, (1, fan_out), jnp.float32, minval=-bound, maxval=bound
        )
    return params


def reference_forward(x, params, operand_dtype=jnp.float32):
    def layer(h, w, b):
        y = jnp.dot(h.astype(operand_dtype), w.astype(operand_dtype),
                    preferred_element_type=jnp.float32)
        return jnp.tanh(y + b)

    h = layer(x, params["w1"], params["b1"])
    h = layer(h, params["w2"], params["b2"])
    return layer(h, params["w3"], params["b3"])


if __name__ == "__main__":
    key = jax.random.PRNGKey(0)
    num_inputs, num_outputs = 16, 8

    key, kx = jax.random.split(key)
    params = init_params(key, num_inputs, num_outputs)

    # Small batch, single full tile. f32 path: bit-tight structural check.
    x = jax.random.normal(kx, (32, num_inputs), jnp.float32)
    ref = reference_forward(x, params)
    out_f32 = jax.block_until_ready(
        feature_extractor_forward(x, params, use_bf16=False)
    )
    assert out_f32.shape == (32, num_outputs)
    assert jnp.allclose(out_f32, ref, atol=1e-5, rtol=1e-5), "f32 mismatch (small B)"

    # Same batch through the default bf16-operand path (looser tolerance).
    out_bf16 = jax.block_until_ready(feature_extractor_forward(x, params))
    assert jnp.allclose(out_bf16, ref, atol=5e-2, rtol=5e-2), "bf16 mismatch (small B)"

    # Non-divisible batch exercising the cdiv / clipped-partial-block path
    # (grid = 2 "parallel" steps, 128-row sub-chunks). f32 first for exactness.
    key, kx2 = jax.random.split(key)
    x2 = jax.random.normal(kx2, (300, num_inputs), jnp.float32)
    ref2 = reference_forward(x2, params)
    out2_f32 = jax.block_until_ready(
        feature_extractor_forward(x2, params, batch_tile=256, sub_chunk=128,
                                  use_bf16=False)
    )
    assert out2_f32.shape == (300, num_outputs)
    assert jnp.allclose(out2_f32, ref2, atol=1e-5, rtol=1e-5), "f32 mismatch (ragged B)"

    out2_bf16 = jax.block_until_ready(
        feature_extractor_forward(x2, params, batch_tile=256, sub_chunk=128)
    )
    assert jnp.allclose(out2_bf16, ref2, atol=5e-2, rtol=5e-2), "bf16 mismatch (ragged B)"

    print("KERNEL_OK")
</pallas_src>

<mosaic_0001>
module attributes {stable_mosaic.version = 11 : i64} {
  func.func @_mlp_kernel(%arg0: i32, %arg1: memref<32x16xf32, #tpu.memory_space<vmem>>, %arg2: memref<16x64xf32, #tpu.memory_space<vmem>>, %arg3: memref<1x64xf32, #tpu.memory_space<vmem>>, %arg4: memref<64x48xf32, #tpu.memory_space<vmem>>, %arg5: memref<1x48xf32, #tpu.memory_space<vmem>>, %arg6: memref<48x8xf32, #tpu.memory_space<vmem>>, %arg7: memref<1x8xf32, #tpu.memory_space<vmem>>, %arg8: memref<32x8xf32, #tpu.memory_space<vmem>>) attributes {dimension_semantics = [#tpu.dimension_semantics<parallel>], iteration_bounds = array<i64: 1>, scalar_prefetch = 0 : i64, scratch_operands = 0 : i64, tpu.core_type = #tpu.core_type<tc>, window_params = [{transform_indices = @transform_0, window_bounds = array<i64: 32, 16>}, {pipeline_mode = #tpu.pipeline_mode<synchronous>, transform_indices = @transform_1, window_bounds = array<i64: 16, 64>}, {pipeline_mode = #tpu.pipeline_mode<synchronous>, transform_indices = @transform_2, window_bounds = array<i64: 1, 64>}, {pipeline_mode = #tpu.pipeline_mode<synchronous>, transform_indices = @transform_3, window_bounds = array<i64: 64, 48>}, {pipeline_mode = #tpu.pipeline_mode<synchronous>, transform_indices = @transform_4, window_bounds = array<i64: 1, 48>}, {pipeline_mode = #tpu.pipeline_mode<synchronous>, transform_indices = @transform_5, window_bounds = array<i64: 48, 8>}, {pipeline_mode = #tpu.pipeline_mode<synchronous>, transform_indices = @transform_6, window_bounds = array<i64: 1, 8>}, {transform_indices = @transform_7, window_bounds = array<i64: 32, 8>}]} {
    %c0 = arith.constant 0 : index
    %c0_0 = arith.constant 0 : index
    %0 = vector.load %arg2[%c0, %c0_0] : memref<16x64xf32, #tpu.memory_space<vmem>>, vector<16x64xf32>
    %c0_1 = arith.constant 0 : index
    %c0_2 = arith.constant 0 : index
    %1 = vector.load %arg4[%c0_1, %c0_2] : memref<64x48xf32, #tpu.memory_space<vmem>>, vector<64x48xf32>
    %c0_3 = arith.constant 0 : index
    %c0_4 = arith.constant 0 : index
    %2 = vector.load %arg6[%c0_3, %c0_4] : memref<48x8xf32, #tpu.memory_space<vmem>>, vector<48x8xf32>
    %c0_5 = arith.constant 0 : index
    %c0_6 = arith.constant 0 : index
    %3 = vector.load %arg3[%c0_5, %c0_6] : memref<1x64xf32, #tpu.memory_space<vmem>>, vector<1x64xf32>
    %4 = vector.shape_cast %3 : vector<1x64xf32> to vector<1x64xf32>
    %5 = vector.broadcast %4 : vector<1x64xf32> to vector<32x64xf32>
    %c0_7 = arith.constant 0 : index
    %c0_8 = arith.constant 0 : index
    %6 = vector.load %arg5[%c0_7, %c0_8] : memref<1x48xf32, #tpu.memory_space<vmem>>, vector<1x48xf32>
    %7 = vector.shape_cast %6 : vector<1x48xf32> to vector<1x48xf32>
    %8 = vector.broadcast %7 : vector<1x48xf32> to vector<32x48xf32>
    %c0_9 = arith.constant 0 : index
    %c0_10 = arith.constant 0 : index
    %9 = vector.load %arg7[%c0_9, %c0_10] : memref<1x8xf32, #tpu.memory_space<vmem>>, vector<1x8xf32>
    %10 = vector.shape_cast %9 : vector<1x8xf32> to vector<1x8xf32>
    %11 = vector.broadcast %10 : vector<1x8xf32> to vector<32x8xf32>
    %c0_i32 = arith.constant 0 : i32
    %c32_i32 = arith.constant 32 : i32
    %12 = arith.muli %c0_i32, %c32_i32 : i32
    %13 = tpu.assume_multiple %12, 32 : i32
    %14 = arith.index_cast %13 : i32 to index
    %c0_11 = arith.constant 0 : index
    %15 = vector.load %arg1[%14, %c0_11] : memref<32x16xf32, #tpu.memory_space<vmem>>, vector<32x16xf32>
    %cst = arith.constant dense<0.000000e+00> : vector<32x64xf32>
    %16 = tpu.matmul %15, %0, %cst {dimension_numbers = #tpu.dot_dimension_numbers<[1], [0], [0], [1], [0, 0, 1, 1], [], []>} : vector<32x16xf32>, vector<16x64xf32>, vector<32x64xf32> -> vector<32x64xf32>
    %17 = arith.addf %16, %5 : vector<32x64xf32>
    %18 = math.tanh %17 : vector<32x64xf32>
    %cst_12 = arith.constant dense<0.000000e+00> : vector<32x48xf32>
    %19 = tpu.matmul %18, %1, %cst_12 {dimension_numbers = #tpu.dot_dimension_numbers<[1], [0], [0], [1], [0, 0, 1, 1], [], []>} : vector<32x64xf32>, vector<64x48xf32>, vector<32x48xf32> -> vector<32x48xf32>
    %20 = arith.addf %19, %8 : vector<32x48xf32>
    %21 = math.tanh %20 : vector<32x48xf32>
    %cst_13 = arith.constant dense<0.000000e+00> : vector<32x8xf32>
    %22 = tpu.matmul %21, %2, %cst_13 {dimension_numbers = #tpu.dot_dimension_numbers<[1], [0], [0], [1], [0, 0, 1, 1], [], []>} : vector<32x48xf32>, vector<48x8xf32>, vector<32x8xf32> -> vector<32x8xf32>
    %23 = arith.addf %22, %11 : vector<32x8xf32>
    %24 = math.tanh %23 : vector<32x8xf32>
    %25 = arith.index_cast %13 : i32 to index
    %c0_14 = arith.constant 0 : index
    %26 = vector.load %arg8[%25, %c0_14] : memref<32x8xf32, #tpu.memory_space<vmem>>, vector<32x8xf32>
    tpu.vector_store %arg8[%25, %c0_14], %24 {strides = array<i32>} : memref<32x8xf32, #tpu.memory_space<vmem>>, vector<32x8xf32>,
    %c1_i32 = arith.constant 1 : i32
    return
  }
  func.func @transform_0(%arg0: i32) -> (i32, i32) {
    %c0_i32 = arith.constant 0 : i32
    %c0_i32_0 = arith.constant 0 : i32
    return %arg0, %c0_i32 : i32, i32
  }
  func.func @transform_1(%arg0: i32) -> (i32, i32) {
    %c0_i32 = arith.constant 0 : i32
    %c0_i32_0 = arith.constant 0 : i32
    %c0_i32_1 = arith.constant 0 : i32
    return %c0_i32, %c0_i32_0 : i32, i32
  }
  func.func @transform_2(%arg0: i32) -> (i32, i32) {
    %c0_i32 = arith.constant 0 : i32
    %c0_i32_0 = arith.constant 0 : i32
    %c0_i32_1 = arith.constant 0 : i32
    return %c0_i32, %c0_i32_0 : i32, i32
  }
  func.func @transform_3(%arg0: i32) -> (i32, i32) {
    %c0_i32 = arith.constant 0 : i32
    %c0_i32_0 = arith.constant 0 : i32
    %c0_i32_1 = arith.constant 0 : i32
    return %c0_i32, %c0_i32_0 : i32, i32
  }
  func.func @transform_4(%arg0: i32) -> (i32, i32) {
    %c0_i32 = arith.constant 0 : i32
    %c0_i32_0 = arith.constant 0 : i32
    %c0_i32_1 = arith.constant 0 : i32
    return %c0_i32, %c0_i32_0 : i32, i32
  }
  func.func @transform_5(%arg0: i32) -> (i32, i32) {
    %c0_i32 = arith.constant 0 : i32
    %c0_i32_0 = arith.constant 0 : i32
    %c0_i32_1 = arith.constant 0 : i32
    return %c0_i32, %c0_i32_0 : i32, i32
  }
  func.func @transform_6(%arg0: i32) -> (i32, i32) {
    %c0_i32 = arith.constant 0 : i32
    %c0_i32_0 = arith.constant 0 : i32
    %c0_i32_1 = arith.constant 0 : i32
    return %c0_i32, %c0_i32_0 : i32, i32
  }
  func.func @transform_7(%arg0: i32) -> (i32, i32) {
    %c0_i32 = arith.constant 0 : i32
    %c0_i32_0 = arith.constant 0 : i32
    return %arg0, %c0_i32 : i32, i32
  }
}

</mosaic_0001>

<llo_original>
// kernel: feature_extractor_forward.1
$region0: #{feature_extractor_forward.1}
  #allocation0 [shape = 'u32[]', space=smem, size = 0x4, offset = 0x4, fixed_abs, tag = 'smem constant byte address 0x4 - core index']
  #allocation1 [shape = 'u32[72,128]{1,0:T(1,128)}', space=vmem, size = 0x9000, scoped, tag = 'internal scratch']
  %s0 = inlined_call_operand.vmem [shape: f32[32,16], index: 0, kind: input, shape index: {}]
  %s1 = inlined_call_operand.vmem [shape: f32[16,64], index: 1, kind: input, shape index: {}]
  %s2 = inlined_call_operand.vmem [shape: f32[1,64], index: 2, kind: input, shape index: {}]
  %s3 = inlined_call_operand.vmem [shape: f32[64,48], index: 3, kind: input, shape index: {}]
  %s4 = inlined_call_operand.vmem [shape: f32[1,48], index: 4, kind: input, shape index: {}]
  %s5 = inlined_call_operand.vmem [shape: f32[48,8], index: 5, kind: input, shape index: {}]
  %s6 = inlined_call_operand.vmem [shape: f32[1,8], index: 6, kind: input, shape index: {}]
  %s7 = inlined_call_operand.vmem [shape: f32[32,8], index: 7, kind: output, shape index: {}]
  %s8 = sld [smem:[#allocation0]]
  $region38: #{feature_extractor_forward.1} parent=0
    _
  %s10 = ssub.s32 1, %s8
  %s11 = scalar_select 0, %s10, %s8
  // Predicated region
  $region2: #{feature_extractor_forward.1} parent=0 // pred_check
    _
  $region3: #{feature_extractor_forward.1} parent=0 // pred_check_branch
    %13 = sbr.rel (0) target = $region5
  $region4: #{feature_extractor_forward.1} parent=0 // pred_region
    _
  $region5: #{feature_extractor_forward.1} parent=0 // pred_fallthru
    _
  // Predicated region
  $region6: #{feature_extractor_forward.1} parent=0 // pred_check
    _
  $region7: #{feature_extractor_forward.1} parent=0 // pred_check_branch
    %15 = sbr.rel (0) target = $region9
  $region8: #{feature_extractor_forward.1} parent=0 // pred_region
    _
  $region9: #{feature_extractor_forward.1} parent=0 // pred_fallthru
    _
  // Predicated region
  $region10: #{feature_extractor_forward.1} parent=0 // pred_check
    _
  $region11: #{feature_extractor_forward.1} parent=0 // pred_check_branch
    %17 = sbr.rel (0) target = $region13
  $region12: #{feature_extractor_forward.1} parent=0 // pred_region
    _
  $region13: #{feature_extractor_forward.1} parent=0 // pred_fallthru
    _
  // Predicated region
  $region14: #{feature_extractor_forward.1} parent=0 // pred_check
    _
  $region15: #{feature_extractor_forward.1} parent=0 // pred_check_branch
    %19 = sbr.rel (0) target = $region17
  $region16: #{feature_extractor_forward.1} parent=0 // pred_region
    _
  $region17: #{feature_extractor_forward.1} parent=0 // pred_fallthru
    _
  // Predicated region
  $region18: #{feature_extractor_forward.1} parent=0 // pred_check
    _
  $region19: #{feature_extractor_forward.1} parent=0 // pred_check_branch
    %21 = sbr.rel (0) target = $region21
  $region20: #{feature_extractor_forward.1} parent=0 // pred_region
    _
  $region21: #{feature_extractor_forward.1} parent=0 // pred_fallthru
    _
  // Predicated region
  $region22: #{feature_extractor_forward.1} parent=0 // pred_check
    _
  $region23: #{feature_extractor_forward.1} parent=0 // pred_check_branch
    %23 = sbr.rel (0) target = $region25
  $region24: #{feature_extractor_forward.1} parent=0 // pred_region
    _
  $region25: #{feature_extractor_forward.1} parent=0 // pred_fallthru
    _
  // Predicated region
  $region26: #{feature_extractor_forward.1} parent=0 // pred_check
    _
  $region27: #{feature_extractor_forward.1} parent=0 // pred_check_branch
    %25 = sbr.rel (0) target = $region29
  $region28: #{feature_extractor_forward.1} parent=0 // pred_region
    _
  $region29: #{feature_extractor_forward.1} parent=0 // pred_fallthru
    _
  %v26 = vld [vmem:[%s1] sm:$0xff]
  %v27 = vld [vmem:[%s1 + $0x8] sm:$0xff]
  %v28 = vld [vmem:[%s3] sm:$0xff]
  %v29 = vld [vmem:[%s3 + $0x8] sm:$0xff]
  %v30 = vld [vmem:[%s3 + $0x10] sm:$0xff]
  %v31 = vld [vmem:[%s3 + $0x18] sm:$0xff]
  %v32 = vld [vmem:[%s3 + $0x20] sm:$0xff]
  %v33 = vld [vmem:[%s3 + $0x28] sm:$0xff]
  %v34 = vld [vmem:[%s3 + $0x30] sm:$0xff]
  %v35 = vld [vmem:[%s3 + $0x38] sm:$0xff]
  %v36 = vld [vmem:[%s5] sm:$0xff]
  %v37 = vld [vmem:[%s5 + $0x8] sm:$0xff]
  %v38 = vld [vmem:[%s5 + $0x10] sm:$0xff]
  %v39 = vld [vmem:[%s5 + $0x18] sm:$0xff]
  %v40 = vld [vmem:[%s5 + $0x20] sm:$0xff]
  %v41 = vld [vmem:[%s5 + $0x28] sm:$0xff]
  %v42 = vld [vmem:[%s2] sm:$0x1]
  %v44 = vperm.slane %v42, 0
  %v46 = vld [vmem:[%s4] sm:$0x1]
  %v48 = vperm.slane %v46, 0
  %v50 = vld [vmem:[%s6] sm:$0x1]
  %v52 = vperm.slane %v50, 0
  %v54 = vld [vmem:[%s0] sm:$0xff]
  %v55 = vld [vmem:[%s0 + $0x8] sm:$0xff]
  %v56 = vld [vmem:[%s0 + $0x10] sm:$0xff]
  %v57 = vld [vmem:[%s0 + $0x18] sm:$0xff]
  %vm58 = vcmask 130048
  %v60 = vsel %vm58, %v54, 0
  %v63 = vsel %vm58, %v55, 0
  %v66 = vsel %vm58, %v56, 0
  %v69 = vsel %vm58, %v57, 0
  %71 = vmatpush.msra.mxu0 0.0
  %72 = vmatpush.msra.mxu0 0.0
  %73 = vmatpush.msra.mxu0 0.0
  %74 = vmatpush.msra.mxu0 0.0
  %75 = vmatpush.msra.mxu0 0.0
  %76 = vmatpush.msra.mxu0 0.0
  %77 = vmatpush.msra.mxu0 0.0
  %78 = vmatpush.msra.mxu0 0.0
  %79 = vmatpush.msra.mxu0 0.0
  %80 = vmatpush.msra.mxu0 0.0
  %81 = vmatpush.msra.mxu0 0.0
  %82 = vmatpush.msra.mxu0 0.0
  %83 = vmatpush.msra.mxu0 0.0
  %84 = vmatpush.msra.mxu0 0.0
  %85 = vmatpush.msra.mxu0 %v27
  %86 = vmatpush.msra.mxu0 %v26
  %87 = vmatmul.f32.gmra.mxu0 %v60
  %v88 = vpop.f32.mrf.mxu0
  %v89 = vadd.f32 %v44, %v88
  %90 = vmatmul.f32.gmra.mxu0 %v63
  %v91 = vpop.f32.mrf.mxu0
  %v92 = vadd.f32 %v44, %v91
  %93 = vmatmul.f32.gmra.mxu0 %v66
  %v94 = vpop.f32.mrf.mxu0
  %v95 = vadd.f32 %v44, %v94
  %96 = vmatmul.f32.gmra.mxu0 %v69
  %v97 = vpop.f32.mrf.mxu0
  %v98 = vadd.f32 %v44, %v97
  %99 = vdwg.mxu0
  %v100 = vtanh.pop %v89
  %v101 = vtanh.pop %v92
  %v102 = vtanh.pop %v95
  %v103 = vtanh.pop %v98
  %vm104 = vcmask 523264
  %v106 = vsel %vm104, %v100, 0
  %v109 = vsel %vm104, %v101, 0
  %v112 = vsel %vm104, %v102, 0
  %v115 = vsel %vm104, %v103, 0
  %117 = vmatpush.msra.mxu0 0.0
  %118 = vmatpush.msra.mxu0 0.0
  %119 = vmatpush.msra.mxu0 0.0
  %120 = vmatpush.msra.mxu0 0.0
  %121 = vmatpush.msra.mxu0 0.0
  %122 = vmatpush.msra.mxu0 0.0
  %123 = vmatpush.msra.mxu0 0.0
  %124 = vmatpush.msra.mxu0 0.0
  %125 = vmatpush.msra.mxu0 %v35
  %126 = vmatpush.msra.mxu0 %v34
  %127 = vmatpush.msra.mxu0 %v33
  %128 = vmatpush.msra.mxu0 %v32
  %129 = vmatpush.msra.mxu0 %v31
  %130 = vmatpush.msra.mxu0 %v30
  %131 = vmatpush.msra.mxu0 %v29
  %132 = vmatpush.msra.mxu0 %v28
  %133 = vmatmul.f32.gmra.mxu0 %v106
  %v134 = vpop.f32.mrf.mxu0
  %v135 = vadd.f32 %v48, %v134
  %136 = vmatmul.f32.gmra.mxu0 %v109
  %v137 = vpop.f32.mrf.mxu0
  %v138 = vadd.f32 %v48, %v137
  %139 = vmatmul.f32.gmra.mxu0 %v112
  %v140 = vpop.f32.mrf.mxu0
  %v141 = vadd.f32 %v48, %v140
  %142 = vmatmul.f32.gmra.mxu0 %v115
  %v143 = vpop.f32.mrf.mxu0
  %v144 = vadd.f32 %v48, %v143
  %145 = vdwg.mxu0
  %v146 = vtanh.pop %v135
  %v147 = vtanh.pop %v138
  %v148 = vtanh.pop %v141
  %v149 = vtanh.pop %v144
  %vm150 = vcmask 392192
  %v152 = vsel %vm150, %v146, 0
  %v155 = vsel %vm150, %v147, 0
  %v158 = vsel %vm150, %v148, 0
  %v161 = vsel %vm150, %v149, 0
  %163 = vmatpush.msra.mxu0 0.0
  %164 = vmatpush.msra.mxu0 0.0
  %165 = vmatpush.msra.mxu0 0.0
  %166 = vmatpush.msra.mxu0 0.0
  %167 = vmatpush.msra.mxu0 0.0
  %168 = vmatpush.msra.mxu0 0.0
  %169 = vmatpush.msra.mxu0 0.0
  %170 = vmatpush.msra.mxu0 0.0
  %171 = vmatpush.msra.mxu0 0.0
  %172 = vmatpush.msra.mxu0 0.0
  %173 = vmatpush.msra.mxu0 %v41
  %174 = vmatpush.msra.mxu0 %v40
  %175 = vmatpush.msra.mxu0 %v39
  %176 = vmatpush.msra.mxu0 %v38
  %177 = vmatpush.msra.mxu0 %v37
  %178 = vmatpush.msra.mxu0 %v36
  %179 = vmatmul.f32.gmra.mxu0 %v152
  %v180 = vpop.f32.mrf.mxu0
  %v181 = vadd.f32 %v52, %v180
  %182 = vmatmul.f32.gmra.mxu0 %v155
  %v183 = vpop.f32.mrf.mxu0
  %v184 = vadd.f32 %v52, %v183
  %185 = vmatmul.f32.gmra.mxu0 %v158
  %v186 = vpop.f32.mrf.mxu0
  %v187 = vadd.f32 %v52, %v186
  %188 = vmatmul.f32.gmra.mxu0 %v161
  %v189 = vpop.f32.mrf.mxu0
  %v190 = vadd.f32 %v52, %v189
  %191 = vdwg.mxu0
  %v192 = vtanh.pop %v181
  %v193 = vtanh.pop %v184
  %v194 = vtanh.pop %v187
  %v195 = vtanh.pop %v190
  %vm196 = vcmask 64512
  %197 = vst.msk [vmem:[%s7] sm:$0xff] %vm196, %v192
  %198 = vst.msk [vmem:[%s7 + $0x8] sm:$0xff] %vm196, %v193
  %199 = vst.msk [vmem:[%s7 + $0x10] sm:$0xff] %vm196, %v194
  %200 = vst.msk [vmem:[%s7 + $0x18] sm:$0xff] %vm196, %v195
  // Predicated region
  $region30: #{feature_extractor_forward.1} parent=0 // pred_check
    _
  $region31: #{feature_extractor_forward.1} parent=0 // pred_check_branch
    %202 = sbr.rel (0) target = $region33
  $region32: #{feature_extractor_forward.1} parent=0 // pred_region
    _
  $region33: #{feature_extractor_forward.1} parent=0 // pred_fallthru
    _
  // Predicated region
  $region34: #{feature_extractor_forward.1} parent=0 // pred_check
    _
  $region35: #{feature_extractor_forward.1} parent=0 // pred_check_branch
    %204 = sbr.rel (0) target = $region37
  $region36: #{feature_extractor_forward.1} parent=0 // pred_region
    _
  $region37: #{feature_extractor_forward.1} parent=0 // pred_fallthru
    _

</llo_original>
